<compile_context>
chip_gen: v5e
topology: v5e:2x2
jax: 0.10.0
libtpu: 0.0.40
codegen_flags: <defaults>
</compile_context>

<pallas_src>
import functools

import jax
import jax.numpy as jnp
from jax import lax
from jax.experimental import pallas as pl
from jax.experimental.pallas import tpu as pltpu

# Sized against v7x (64 MiB physical VMEM) with ~25% headroom; safe on v5e/v6e too.
_VMEM_LIMIT = 48 * 1024 * 1024


def _pick_tile(dim, target, align):
    """Largest tile <= target that is either the full dim or an align-multiple divisor of dim."""
    if dim <= target:
        return dim
    t = (target // align) * align
    while t >= align:
        if dim % t == 0:
            return t
        t -= align
    return dim  # fallback: whole dimension (always a legal block)


# ---------------------------------------------------------------------------
# Tiled, pipelined linear:  y = x @ W + b
# ---------------------------------------------------------------------------
def _linear_kernel(x_ref, w_ref, b_ref, o_ref, acc_ref):
    kk = pl.program_id(2)

    @pl.when(kk == 0)
    def _():
        acc_ref[...] = jnp.zeros(acc_ref.shape, jnp.float32)

    acc_ref[...] += jnp.dot(x_ref[...], w_ref[...], preferred_element_type=jnp.float32)

    @pl.when(kk == pl.num_programs(2) - 1)
    def _():
        o_ref[...] = (acc_ref[...] + b_ref[...].astype(jnp.float32)).astype(o_ref.dtype)


def linear(x2d, w, b, *, out_dtype=None, tm_target=256, tn_target=256, tk_target=512):
    M, K = x2d.shape
    K2, N = w.shape
    assert K == K2
    out_dtype = out_dtype or x2d.dtype

    tm = _pick_tile(M, tm_target, 8)     # sublane-aligned
    tk = _pick_tile(K, tk_target, 128)   # lane-aligned (x last dim)
    tn = _pick_tile(N, tn_target, 128)   # lane-aligned (w / out last dim)
    grid = (M // tm, N // tn, K // tk)

    return pl.pallas_call(
        _linear_kernel,
        out_shape=jax.ShapeDtypeStruct((M, N), out_dtype),
        grid=grid,
        in_specs=[
            pl.BlockSpec((tm, tk), lambda i, j, kk: (i, kk)),
            pl.BlockSpec((tk, tn), lambda i, j, kk: (kk, j)),
            pl.BlockSpec((1, tn), lambda i, j, kk: (0, j)),
        ],
        out_specs=pl.BlockSpec((tm, tn), lambda i, j, kk: (i, j)),
        scratch_shapes=[pltpu.VMEM((tm, tn), jnp.float32)],
        compiler_params=pltpu.CompilerParams(
            dimension_semantics=("parallel", "parallel", "arbitrary"),
            vmem_limit_bytes=_VMEM_LIMIT),
    )(x2d, w, b.reshape(1, N))


# ---------------------------------------------------------------------------
# Multi-head scaled-dot attention, flash-style, heads handled inside the kernel
# (reads (B, T, H*dk)/(B, T, H*dv) directly; writes lane-dense (B, T, H*dv))
# ---------------------------------------------------------------------------
def _mha_flash_kernel(q_ref, k_ref, v_ref, o_ref, m_ref, l_ref, acc_ref,
                      *, num_head, dk, dv, scale):
    ki = pl.program_id(2)

    @pl.when(ki == 0)
    def _():
        m_ref[...] = jnp.full(m_ref.shape, -jnp.inf, jnp.float32)
        l_ref[...] = jnp.zeros(l_ref.shape, jnp.float32)
        acc_ref[...] = jnp.zeros(acc_ref.shape, jnp.float32)

    q = q_ref[0]   # (tq,  H*dk)
    k = k_ref[0]   # (tkv, H*dk)
    v = v_ref[0]   # (tkv, H*dv)

    for h in range(num_head):
        # fold 1/sqrt(dk) into q (tq*dk mults instead of tq*tkv)
        qh = q[:, h * dk:(h + 1) * dk] * scale            # (tq, dk), input dtype
        kh = k[:, h * dk:(h + 1) * dk]                    # (tkv, dk)
        vh = v[:, h * dv:(h + 1) * dv]                    # (tkv, dv)

        # scores: contract last dims directly (no k.T / XLU transpose), f32 accumulation
        s = lax.dot_general(qh, kh, (((1,), (1,)), ((), ())),
                            preferred_element_type=jnp.float32)      # (tq, tkv)

        m_prev = m_ref[h]                                  # (tq, 1) f32
        l_prev = l_ref[h]
        m_new = jnp.maximum(m_prev, jnp.max(s, axis=-1, keepdims=True))
        alpha = jnp.exp(m_prev - m_new)
        p = jnp.exp(s - m_new)                             # (tq, tkv) f32
        l_ref[h] = alpha * l_prev + jnp.sum(p, axis=-1, keepdims=True)
        acc_ref[h] = alpha * acc_ref[h] + jnp.dot(
            p.astype(vh.dtype), vh, preferred_element_type=jnp.float32)
        m_ref[h] = m_new

    @pl.when(ki == pl.num_programs(2) - 1)
    def _():
        # normalize the (tq, dv) outputs (not the (tq, tkv) probabilities) and emit one
        # lane-dense (tq, H*dv) store.
        outs = []
        for h in range(num_head):
            inv_l = pl.reciprocal(l_ref[h], approx=False)
            outs.append(acc_ref[h] * inv_l)
        o_ref[0] = jnp.concatenate(outs, axis=-1).astype(o_ref.dtype)


def mha_attention(q, k, v, *, num_head, hidden_size, output_value_size,
                  tq_target=256, tkv_target=256):
    """q,k: (B, Tq/Tk, hidden_size); v: (B, Tk, output_value_size) -> (B, Tq, output_value_size)."""
    B, Tq, _ = q.shape
    Tk = k.shape[1]
    dk = hidden_size // num_head
    dv = output_value_size // num_head
    scale = float(dk) ** (-0.5)

    tq = _pick_tile(Tq, tq_target, 8)
    tkv = _pick_tile(Tk, tkv_target, 8)
    grid = (B, Tq // tq, Tk // tkv)

    kernel = functools.partial(_mha_flash_kernel, num_head=num_head, dk=dk, dv=dv, scale=scale)
    return pl.pallas_call(
        kernel,
        out_shape=jax.ShapeDtypeStruct((B, Tq, output_value_size), q.dtype),
        grid=grid,
        in_specs=[
            pl.BlockSpec((1, tq, hidden_size), lambda b, qi, ki: (b, qi, 0)),
            pl.BlockSpec((1, tkv, hidden_size), lambda b, qi, ki: (b, ki, 0)),
            pl.BlockSpec((1, tkv, output_value_size), lambda b, qi, ki: (b, ki, 0)),
        ],
        out_specs=pl.BlockSpec((1, tq, output_value_size), lambda b, qi, ki: (b, qi, 0)),
        scratch_shapes=[
            pltpu.VMEM((num_head, tq, 1), jnp.float32),    # running max  m
            pltpu.VMEM((num_head, tq, 1), jnp.float32),    # running sum  l
            pltpu.VMEM((num_head, tq, dv), jnp.float32),   # running acc
        ],
        compiler_params=pltpu.CompilerParams(
            dimension_semantics=("parallel", "parallel", "arbitrary"),
            vmem_limit_bytes=_VMEM_LIMIT),
    )(q, k, v)


# ---------------------------------------------------------------------------
# MultiHeadedAttention forward (trivial self-attention path)
# ---------------------------------------------------------------------------
def multi_headed_attention(query, params, *, num_head, hidden_size, output_value_size):
    """Equivalent to MultiHeadedAttention.forward(query, kv=None, kv_memory=None)."""
    B, Tq, Dq = query.shape
    dtype = query.dtype

    # fused QKV projection (tiled/pipelined); intermediates keep the caller's dtype
    qkv = linear(query.reshape(B * Tq, Dq), params["w_qkv"], params["b_qkv"], out_dtype=dtype)
    qkv = qkv.reshape(B, Tq, 2 * hidden_size + output_value_size)
    q, k, v = jnp.split(qkv, [hidden_size, 2 * hidden_size], axis=-1)
    kv_memory = (k, v)  # projected (un-headed) keys/values, as in the PyTorch module

    # attention directly on the (B, T, H*dh) layout — no split/merge head transposes
    x = mha_attention(q, k, v, num_head=num_head, hidden_size=hidden_size,
                      output_value_size=output_value_size)          # (B, Tq, output_value_size)

    out = linear(x.reshape(B * Tq, output_value_size), params["w_out"], params["b_out"],
                 out_dtype=dtype)
    return out.reshape(B, Tq, output_value_size), kv_memory
    # TODO(synk): mask / dropout / kv / kv_memory-expansion / 'additive' mode paths not exercised.
    # TODO(synk): optional full fusion (QKV + attention + out-proj in one pallas_call) and
    #             bf16/fp8 weight casting toggles for v6e/v7x left as follow-ups.


# pure-JAX reference for verification
def reference(query, params, *, num_head, hidden_size, output_value_size):
    B, Tq, Dq = query.shape
    qkv = query.reshape(B * Tq, Dq) @ params["w_qkv"] + params["b_qkv"]
    qkv = qkv.reshape(B, Tq, -1)
    q, k, v = jnp.split(qkv, [hidden_size, 2 * hidden_size], axis=-1)
    dk = hidden_size // num_head
    dv = output_value_size // num_head
    qh = q.reshape(B, Tq, num_head, dk).transpose(0, 2, 1, 3)
    kh = k.reshape(B, Tq, num_head, dk).transpose(0, 2, 1, 3)
    vh = v.reshape(B, Tq, num_head, dv).transpose(0, 2, 1, 3)
    scores = jnp.einsum("bhqd,bhkd->bhqk", qh, kh) * (float(dk) ** -0.5)
    p = jax.nn.softmax(scores, axis=-1)
    x = jnp.einsum("bhqk,bhkd->bhqd", p, vh)
    x = x.transpose(0, 2, 1, 3).reshape(B, Tq, output_value_size)
    out = x.reshape(B * Tq, output_value_size) @ params["w_out"] + params["b_out"]
    return out.reshape(B, Tq, output_value_size), (k, v)


if __name__ == "__main__":
    # small deterministic config
    batch, seq = 2, 8
    num_head = 4
    query_size = 32          # input_sizes = (32, None, None)
    hidden_size = 32
    output_value_size = 32

    key = jax.random.PRNGKey(0)
    k0, k1, k2, k3, k4 = jax.random.split(key, 5)

    params = {
        # map_qkv: Linear(query_size, 2*hidden_size + output_value_size)
        "w_qkv": jax.random.normal(k0, (query_size, 2 * hidden_size + output_value_size),
                                   jnp.float32) * 0.1,
        "b_qkv": jax.random.normal(k1, (2 * hidden_size + output_value_size,), jnp.float32) * 0.1,
        # linear_out: Linear(output_value_size, output_value_size)
        "w_out": jax.random.normal(k2, (output_value_size, output_value_size), jnp.float32) * 0.1,
        "b_out": jax.random.normal(k3, (output_value_size,), jnp.float32) * 0.1,
    }

    query = jax.random.normal(k4, (batch, seq, query_size), jnp.float32)

    out, (k_mem, v_mem) = multi_headed_attention(
        query, params,
        num_head=num_head, hidden_size=hidden_size, output_value_size=output_value_size)
    out = jax.block_until_ready(out)
    k_mem = jax.block_until_ready(k_mem)
    v_mem = jax.block_until_ready(v_mem)

    ref_out, (ref_k, ref_v) = reference(
        query, params,
        num_head=num_head, hidden_size=hidden_size, output_value_size=output_value_size)

    assert out.shape == (batch, seq, output_value_size)
    assert k_mem.shape == (batch, seq, hidden_size)
    assert v_mem.shape == (batch, seq, output_value_size)
    assert jnp.allclose(out, ref_out, atol=1e-4, rtol=1e-4)
    assert jnp.allclose(k_mem, ref_k, atol=1e-4, rtol=1e-4)
    assert jnp.allclose(v_mem, ref_v, atol=1e-4, rtol=1e-4)

    print("KERNEL_OK")
</pallas_src>

<mosaic_0001>
module attributes {stable_mosaic.version = 11 : i64} {
  func.func @_linear_kernel(%arg0: i32, %arg1: i32, %arg2: i32, %arg3: memref<16x32xf32, #tpu.memory_space<vmem>>, %arg4: memref<32x96xf32, #tpu.memory_space<vmem>>, %arg5: memref<1x96xf32, #tpu.memory_space<vmem>>, %arg6: memref<16x96xf32, #tpu.memory_space<vmem>>, %arg7: memref<16x96xf32, #tpu.memory_space<vmem>>) attributes {dimension_semantics = [#tpu.dimension_semantics<parallel>, #tpu.dimension_semantics<parallel>, #tpu.dimension_semantics<arbitrary>], iteration_bounds = array<i64: 1, 1, 1>, scalar_prefetch = 0 : i64, scratch_operands = 1 : i64, tpu.core_type = #tpu.core_type<tc>, window_params = [{transform_indices = @transform_0, window_bounds = array<i64: 16, 32>}, {transform_indices = @transform_1, window_bounds = array<i64: 32, 96>}, {transform_indices = @transform_2, window_bounds = array<i64: 1, 96>}, {transform_indices = @transform_3, window_bounds = array<i64: 16, 96>}]} {
    %c0_i32 = arith.constant 0 : i32
    %0 = arith.cmpi eq, %arg2, %c0_i32 : i32
    %1 = arith.extui %0 : i1 to i32
    %c0_i32_0 = arith.constant 0 : i32
    %2 = arith.cmpi ne, %1, %c0_i32_0 : i32
    scf.if %2 {
      %cst_10 = arith.constant 0.000000e+00 : f32
      %12 = vector.broadcast %cst_10 : f32 to vector<16x96xf32>
      %c0_11 = arith.constant 0 : index
      %c0_12 = arith.constant 0 : index
      %13 = vector.load %arg7[%c0_11, %c0_12] : memref<16x96xf32, #tpu.memory_space<vmem>>, vector<16x96xf32>
      tpu.vector_store %arg7[%c0_11, %c0_12], %12 {strides = array<i32>} : memref<16x96xf32, #tpu.memory_space<vmem>>, vector<16x96xf32>,
    } else {
    }
    %c0 = arith.constant 0 : index
    %c0_1 = arith.constant 0 : index
    %3 = vector.load %arg7[%c0, %c0_1] : memref<16x96xf32, #tpu.memory_space<vmem>>, vector<16x96xf32>
    %c0_2 = arith.constant 0 : index
    %c0_3 = arith.constant 0 : index
    %4 = vector.load %arg3[%c0_2, %c0_3] : memref<16x32xf32, #tpu.memory_space<vmem>>, vector<16x32xf32>
    %c0_4 = arith.constant 0 : index
    %c0_5 = arith.constant 0 : index
    %5 = vector.load %arg4[%c0_4, %c0_5] : memref<32x96xf32, #tpu.memory_space<vmem>>, vector<32x96xf32>
    %cst = arith.constant dense<0.000000e+00> : vector<16x96xf32>
    %6 = tpu.matmul %4, %5, %cst {dimension_numbers = #tpu.dot_dimension_numbers<[1], [0], [0], [1], [0, 0, 1, 1], [], []>} : vector<16x32xf32>, vector<32x96xf32>, vector<16x96xf32> -> vector<16x96xf32>
    %7 = arith.addf %3, %6 : vector<16x96xf32>
    %c0_6 = arith.constant 0 : index
    %c0_7 = arith.constant 0 : index
    %8 = vector.load %arg7[%c0_6, %c0_7] : memref<16x96xf32, #tpu.memory_space<vmem>>, vector<16x96xf32>
    tpu.vector_store %arg7[%c0_6, %c0_7], %7 {strides = array<i32>} : memref<16x96xf32, #tpu.memory_space<vmem>>, vector<16x96xf32>,
    %c0_i32_8 = arith.constant 0 : i32
    %9 = arith.cmpi eq, %arg2, %c0_i32_8 : i32
    %10 = arith.extui %9 : i1 to i32
    %c0_i32_9 = arith.constant 0 : i32
    %11 = arith.cmpi ne, %10, %c0_i32_9 : i32
    scf.if %11 {
      %c0_10 = arith.constant 0 : index
      %c0_11 = arith.constant 0 : index
      %12 = vector.load %arg7[%c0_10, %c0_11] : memref<16x96xf32, #tpu.memory_space<vmem>>, vector<16x96xf32>
      %c0_12 = arith.constant 0 : index
      %c0_13 = arith.constant 0 : index
      %13 = vector.load %arg5[%c0_12, %c0_13] : memref<1x96xf32, #tpu.memory_space<vmem>>, vector<1x96xf32>
      %14 = vector.broadcast %13 : vector<1x96xf32> to vector<16x96xf32>
      %15 = arith.addf %12, %14 : vector<16x96xf32>
      %c0_14 = arith.constant 0 : index
      %c0_15 = arith.constant 0 : index
      %16 = vector.load %arg6[%c0_14, %c0_15] : memref<16x96xf32, #tpu.memory_space<vmem>>, vector<16x96xf32>
      tpu.vector_store %arg6[%c0_14, %c0_15], %15 {strides = array<i32>} : memref<16x96xf32, #tpu.memory_space<vmem>>, vector<16x96xf32>,
    } else {
    }
    return
  }
  func.func @transform_0(%arg0: i32, %arg1: i32, %arg2: i32) -> (i32, i32) {
    %c0_i32 = arith.constant 0 : i32
    return %arg0, %arg2 : i32, i32
  }
  func.func @transform_1(%arg0: i32, %arg1: i32, %arg2: i32) -> (i32, i32) {
    %c0_i32 = arith.constant 0 : i32
    return %arg2, %arg1 : i32, i32
  }
  func.func @transform_2(%arg0: i32, %arg1: i32, %arg2: i32) -> (i32, i32) {
    %c0_i32 = arith.constant 0 : i32
    %c0_i32_0 = arith.constant 0 : i32
    return %c0_i32, %arg1 : i32, i32
  }
  func.func @transform_3(%arg0: i32, %arg1: i32, %arg2: i32) -> (i32, i32) {
    %c0_i32 = arith.constant 0 : i32
    return %arg0, %arg1 : i32, i32
  }
}

</mosaic_0001>

<llo_original>
// kernel: tpu_custom_call.1
$region0: #{tpu_custom_call.1}
  #allocation0 [shape = 'u32[]', space=smem, size = 0x4, offset = 0x4, fixed_abs, tag = 'smem constant byte address 0x4 - core index']
  #allocation1 [shape = 'u32[72,128]{1,0:T(1,128)}', space=vmem, size = 0x9000, scoped, tag = 'internal scratch']
  #allocation2 [shape = 'f32[16,96]{1,0:T(8,128)}', space=vmem, size = 0x2000, scoped, tag = 'scratch operand']
  %s0 = inlined_call_operand.hbm [shape: f32[16,32], index: 0, kind: input, shape index: {}]
  %s1 = inlined_call_operand.hbm [shape: f32[32,96], index: 1, kind: input, shape index: {}]
  %s2 = inlined_call_operand.vmem [shape: f32[1,96], index: 2, kind: input, shape index: {}]
  %s3 = inlined_call_operand.hbm [shape: f32[16,96], index: 3, kind: output, shape index: {}]
  %s4 = sld [smem:[#allocation0]]
  $region38: #{tpu_custom_call.1} parent=0
    _
  %s6 = ssub.s32 1, %s4
  %s7 = scalar_select 0, %s6, %s4
  $region1: #{tpu_custom_call.1} parent=0
    #allocation3 [shape = 'u8[8192]{0}', space=vmem, size = 0x2000, scoped, tag = 'input window, operand 0, single buffered']
    #allocation4 [shape = 's32[1]{0}', space=sflag, size = 0x4, scoped, tag = 'scoped memory for tpu_custom_call.1']
    #allocation5 [shape = 's32[1]{0}', space=sflag, size = 0x4, scoped, tag = 'scoped memory for tpu_custom_call.1']
    #allocation6 [shape = 'u8[16384]{0}', space=vmem, size = 0x4000, scoped, tag = 'input window, operand 1, single buffered']
    #allocation7 [shape = 's32[1]{0}', space=sflag, size = 0x4, scoped, tag = 'scoped memory for tpu_custom_call.1']
    #allocation8 [shape = 'u8[8192]{0}', space=vmem, size = 0x2000, scoped, tag = 'output window, operand 0, single buffered']
    %8 = vsyncpa [#allocation4], 0
    %9 = vsyncpa [#allocation7], 0
    %10 = vsyncpa [#allocation5], 0
    // Predicated region
    $region2: #{tpu_custom_call.1} parent=1 // pred_check
      _
    $region3: #{tpu_custom_call.1} parent=1 // pred_check_branch
      %12 = sbr.rel (0) target = $region5
    $region4: #{tpu_custom_call.1} parent=1 // pred_region
      %14 = vsyncadd [#allocation4], 0
      %s15 = sshll.u32 %s0, 4
      %s16 = int_to_ptr.hbm [resolvable:$true] %s15
      %s17 = sshll.u32 [#allocation3], 4
      %s18 = int_to_ptr.vmem [resolvable:$true] %s17
      %23 = dma.hbm_to_vmem [thread:$0]  %s16, 256, %s18, [#allocation4], 128, 128, 8
    $region5: #{tpu_custom_call.1} parent=1 // pred_fallthru
      _
    // Predicated region
    $region6: #{tpu_custom_call.1} parent=1 // pred_check
      _
    $region7: #{tpu_custom_call.1} parent=1 // pred_check_branch
      %25 = sbr.rel (0) target = $region9
    $region8: #{tpu_custom_call.1} parent=1 // pred_region
      %27 = vsyncadd [#allocation7], 0
      %s28 = sshll.u32 %s1, 4
      %s29 = int_to_ptr.hbm [resolvable:$true] %s28
      %s30 = sshll.u32 [#allocation6], 4
      %s31 = int_to_ptr.vmem [resolvable:$true] %s30
      %36 = dma.hbm_to_vmem [thread:$0]  %s29, 512, %s31, [#allocation7], 128, 128, 8
    $region9: #{tpu_custom_call.1} parent=1 // pred_fallthru
      _
    // Predicated region
    $region10: #{tpu_custom_call.1} parent=1 // pred_check
      _
    $region11: #{tpu_custom_call.1} parent=1 // pred_check_branch
      %38 = sbr.rel (0) target = $region13
    $region12: #{tpu_custom_call.1} parent=1 // pred_region
      _
    $region13: #{tpu_custom_call.1} parent=1 // pred_fallthru
      _
    // Predicated region
    $region14: #{tpu_custom_call.1} parent=1 // pred_check
      _
    $region15: #{tpu_custom_call.1} parent=1 // pred_check_branch
      %40 = sbr.rel (0) target = $region17
    $region16: #{tpu_custom_call.1} parent=1 // pred_region
      %42 = dma.done [#allocation4], 256
    $region17: #{tpu_custom_call.1} parent=1 // pred_fallthru
      _
    // Predicated region
    $region18: #{tpu_custom_call.1} parent=1 // pred_check
      _
    $region19: #{tpu_custom_call.1} parent=1 // pred_check_branch
      %44 = sbr.rel (0) target = $region21
    $region20: #{tpu_custom_call.1} parent=1 // pred_region
      %46 = dma.done [#allocation7], 512
    $region21: #{tpu_custom_call.1} parent=1 // pred_fallthru
      _
    %p47 = scmp.eq.s32.totalorder 0, 0
    // Predicated region
    $region22: #{tpu_custom_call.1} parent=1 // pred_check
      %p48 = pneg %p47
    $region23: #{tpu_custom_call.1} parent=1 // pred_check_branch
      %50 = sbr.rel (%p48) target = $region25
    $region24: #{tpu_custom_call.1} parent=1 // pred_region
      %vm51 = vcmask 785408
      %52 = vst.msk [vmem:[#allocation2] sm:$0xff] %vm51, 0.0
      %53 = vst.msk [vmem:[#allocation2 + $0x8] sm:$0xff] %vm51, 0.0
    $region25: #{tpu_custom_call.1} parent=1 // pred_fallthru
      _
    %v54 = vld [vmem:[#allocation2] sm:$0xff]
    %v55 = vld [vmem:[#allocation2 + $0x8] sm:$0xff]
    %v56 = vld [vmem:[#allocation3] sm:$0xff]
    %v57 = vld [vmem:[#allocation3 + $0x8] sm:$0xff]
    %v58 = vld [vmem:[#allocation6] sm:$0xff]
    %v59 = vld [vmem:[#allocation6 + $0x8] sm:$0xff]
    %v60 = vld [vmem:[#allocation6 + $0x10] sm:$0xff]
    %v61 = vld [vmem:[#allocation6 + $0x18] sm:$0xff]
    %vm62 = vcmask 261120
    %v64 = vsel %vm62, %v56, 0
    %v67 = vsel %vm62, %v57, 0
    %69 = vmatpush.msra.mxu0 0.0
    %70 = vmatpush.msra.mxu0 0.0
    %71 = vmatpush.msra.mxu0 0.0
    %72 = vmatpush.msra.mxu0 0.0
    %73 = vmatpush.msra.mxu0 0.0
    %74 = vmatpush.msra.mxu0 0.0
    %75 = vmatpush.msra.mxu0 0.0
    %76 = vmatpush.msra.mxu0 0.0
    %77 = vmatpush.msra.mxu0 0.0
    %78 = vmatpush.msra.mxu0 0.0
    %79 = vmatpush.msra.mxu0 0.0
    %80 = vmatpush.msra.mxu0 0.0
    %81 = vmatpush.msra.mxu0 %v61
    %82 = vmatpush.msra.mxu0 %v60
    %83 = vmatpush.msra.mxu0 %v59
    %84 = vmatpush.msra.mxu0 %v58
    %85 = vmatmul.f32.gmra.mxu0 %v64
    %v86 = vpop.f32.mrf.mxu0
    %v87 = vadd.f32 0.0, %v86
    %88 = vmatmul.f32.gmra.mxu0 %v67
    %v89 = vpop.f32.mrf.mxu0
    %v90 = vadd.f32 0.0, %v89
    %91 = vdwg.mxu0
    %v92 = vadd.f32 %v54, %v87
    %v93 = vadd.f32 %v55, %v90
    %vm94 = vcmask 785408
    %95 = vst.msk [vmem:[#allocation2] sm:$0xff] %vm94, %v92
    %96 = vst.msk [vmem:[#allocation2 + $0x8] sm:$0xff] %vm94, %v93
    // Predicated region
    $region26: #{tpu_custom_call.1} parent=1 // pred_check
      %p97 = pneg %p47
    $region27: #{tpu_custom_call.1} parent=1 // pred_check_branch
      %99 = sbr.rel (%p97) target = $region29
    $region28: #{tpu_custom_call.1} parent=1 // pred_region
      %v100 = vld [vmem:[#allocation2] sm:$0xff]
      %v101 = vld [vmem:[#allocation2 + $0x8] sm:$0xff]
      %v102 = vld [vmem:[%s2] sm:$0x1]
      %v104 = vperm.slane %v102, 0
      %v106 = vadd.f32 %v100, %v104
      %v107 = vadd.f32 %v101, %v104
      %108 = vst.msk [vmem:[#allocation8] sm:$0xff] %vm94, %v106
      %109 = vst.msk [vmem:[#allocation8 + $0x8] sm:$0xff] %vm94, %v107
    $region29: #{tpu_custom_call.1} parent=1 // pred_fallthru
      _
    // Predicated region
    $region30: #{tpu_custom_call.1} parent=1 // pred_check
      _
    $region31: #{tpu_custom_call.1} parent=1 // pred_check_branch
      %111 = sbr.rel (0) target = $region33
    $region32: #{tpu_custom_call.1} parent=1 // pred_region
      %113 = vsyncadd [#allocation5], 0
      %s114 = sshll.u32 [#allocation8], 4
      %s115 = int_to_ptr.vmem [resolvable:$true] %s114
      %s116 = sshll.u32 %s3, 4
      %s117 = int_to_ptr.hbm [resolvable:$true] %s116
      %122 = dma.vmem_to_hbm [thread:$0]  %s115, 256, %s117, [#allocation5], 128, 128, 8
    $region33: #{tpu_custom_call.1} parent=1 // pred_fallthru
      _
    // Predicated region
    $region34: #{tpu_custom_call.1} parent=1 // pred_check
      _
    $region35: #{tpu_custom_call.1} parent=1 // pred_check_branch
      %124 = sbr.rel (0) target = $region37
    $region36: #{tpu_custom_call.1} parent=1 // pred_region
      %126 = dma.done [#allocation5], 256
    $region37: #{tpu_custom_call.1} parent=1 // pred_fallthru
      _
    %127 = vsyncpa [#allocation4], 1
    %128 = vsyncpa [#allocation7], 1
    %129 = vsyncpa [#allocation5], 1

</llo_original>
